<compile_context>
chip_gen: v7x
topology: tpu7x:2x2x1
jax: 0.10.0
libtpu: 0.0.40
codegen_flags: <defaults>
</compile_context>

<pallas_src>
import jax
import jax.numpy as jnp
from jax.experimental import pallas as pl
from jax.experimental.pallas import tpu as pltpu

# Module hyperparameters (D_in, H, D_out are free globals in the PyTorch file).
D_IN = 32
H = 64
D_OUT = 16
BATCH = 8

_LANE = 128          # hidden dim padded to a lane-dense multiple of this
_BF16_SUBLANE = 16   # bf16 packs 16 sublanes per vreg -> batch tiles are x16
_BLOCK_M = 512       # max rows per grid step


def _round_up(x, m):
    return ((x + m - 1) // m) * m


def _cdiv(a, b):
    return -(-a // b)


def _has_bf16_vpu():
    """v6e / v7x have a bf16 VPU; v5e and older do not."""
    try:
        kind = jax.devices()[0].device_kind.lower()
    except Exception:
        return True
    return not any(g in kind for g in ("v2", "v3", "v4", "v5"))


# Epilogue (bias-add + ReLU) and output dtype, chosen once per process.
_EPI_DTYPE = jnp.bfloat16 if _has_bf16_vpu() else jnp.float32


def mlp_kernel(x_ref, w1_ref, b1_ref, w2_ref, b2_ref, o_ref):
    # Layer 1: (TM, D_in) @ (D_in, Hp) on the MXU, f32 accumulation.
    h = jnp.dot(x_ref[...], w1_ref[...], preferred_element_type=jnp.float32)
    # Bias + ReLU in the bias dtype (bf16 on v6e/v7x, f32 on v5e).
    h = jnp.maximum(h.astype(b1_ref.dtype) + b1_ref[...], 0)
    # Layer 2: (TM, Hp) @ (Hp, D_out), f32 accumulation.
    y = jnp.dot(h.astype(w2_ref.dtype), w2_ref[...],
                preferred_element_type=jnp.float32)
    y = jnp.maximum(y.astype(b2_ref.dtype) + b2_ref[...], 0)
    o_ref[...] = y.astype(o_ref.dtype)


def prepare_params(w1, b1, w2, b2):
    """One-time parameter prep: pad hidden dim to 128 lanes, cast weights to bf16.

    Zero-padding is exact for Linear+bias+ReLU: padded W/b entries are 0 and
    relu(0) = 0, so padded hidden columns contribute nothing to layer 2.
    """
    d_in, h_dim = w1.shape
    d_out = w2.shape[1]
    h_p = _round_up(h_dim, _LANE)

    w1_p = jnp.zeros((d_in, h_p), jnp.bfloat16).at[:, :h_dim].set(
        w1.astype(jnp.bfloat16))
    b1_p = jnp.zeros((1, h_p), _EPI_DTYPE).at[:, :h_dim].set(
        b1.reshape(1, -1).astype(_EPI_DTYPE))
    w2_p = jnp.zeros((h_p, d_out), jnp.bfloat16).at[:h_dim, :].set(
        w2.astype(jnp.bfloat16))
    b2_p = b2.reshape(1, -1).astype(_EPI_DTYPE)
    return w1_p, b1_p, w2_p, b2_p


def _batch_tiling(n):
    """Pick (tile_rows, padded_rows, num_tiles): multiples of 16, minimal
    padding, and >= 2 grid steps when possible so both v7x TCs get work."""
    n_16 = _round_up(n, _BF16_SUBLANE)
    num_tiles = max(1, _cdiv(n_16, _BLOCK_M))
    if n_16 >= 2 * _BF16_SUBLANE:
        num_tiles = max(num_tiles, 2)
    tm = _round_up(_cdiv(n_16, num_tiles), _BF16_SUBLANE)
    num_tiles = _cdiv(n_16, tm)
    return tm, tm * num_tiles, num_tiles


@jax.jit
def mlp_forward(x, w1_p, b1_p, w2_p, b2_p):
    """x: (N, D_in) f32; params already prepared by prepare_params."""
    n, d_in = x.shape
    h_p = w1_p.shape[1]
    d_out = w2_p.shape[1]

    tm, n_p, num_tiles = _batch_tiling(n)

    # Pad batch rows and cast to bf16 (fused under jit; D_in stays unpadded).
    x_p = jnp.zeros((n_p, d_in), jnp.bfloat16).at[:n, :].set(
        x.astype(jnp.bfloat16))

    out_bytes = jnp.dtype(_EPI_DTYPE).itemsize
    flops = 2 * n_p * (d_in * h_p + h_p * d_out)
    bytes_accessed = (x_p.size * 2 + w1_p.size * 2 + w2_p.size * 2
                      + b1_p.size * out_bytes + b2_p.size * out_bytes
                      + n_p * d_out * out_bytes)

    # Resident weights/biases + double-buffered x / o tiles, with 2x headroom.
    vmem_need = (d_in * h_p * 2 + h_p * d_out * 2
                 + (h_p + d_out) * out_bytes
                 + 2 * tm * d_in * 2
                 + 2 * tm * d_out * out_bytes)
    vmem_limit = min(max(2 * vmem_need, 16 << 20), 48 << 20)

    out_p = pl.pallas_call(
        mlp_kernel,
        out_shape=jax.ShapeDtypeStruct((n_p, d_out), _EPI_DTYPE),
        grid_spec=pltpu.PrefetchScalarGridSpec(
            num_scalar_prefetch=0,
            grid=(num_tiles,),
            in_specs=[
                pl.BlockSpec((tm, d_in), lambda i: (i, 0)),    # x: batch-tiled
                pl.BlockSpec((d_in, h_p), lambda i: (0, 0)),   # W1: resident
                pl.BlockSpec((1, h_p), lambda i: (0, 0)),      # b1: resident
                pl.BlockSpec((h_p, d_out), lambda i: (0, 0)),  # W2: resident
                pl.BlockSpec((1, d_out), lambda i: (0, 0)),    # b2: resident
            ],
            out_specs=pl.BlockSpec((tm, d_out), lambda i: (i, 0)),
        ),
        compiler_params=pltpu.CompilerParams(
            dimension_semantics=("parallel",),   # shard batch tiles across TCs
            vmem_limit_bytes=int(vmem_limit),
        ),
        cost_estimate=pl.CostEstimate(
            flops=flops, transcendentals=0, bytes_accessed=bytes_accessed),
    )(x_p, w1_p, b1_p, w2_p, b2_p)

    return out_p[:n, :]   # strip batch padding; D_out was never padded


def reference_forward(x, w1, b1, w2, b2):
    h = jnp.maximum(x @ w1 + b1.reshape(1, -1), 0.0)
    return jnp.maximum(h @ w2 + b2.reshape(1, -1), 0.0)


if __name__ == "__main__":
    key = jax.random.PRNGKey(0)
    kx, k1, kb1, k2, kb2 = jax.random.split(key, 5)

    # Deterministic inputs / params (PyTorch-style uniform init ranges).
    x = jax.random.normal(kx, (BATCH, D_IN), dtype=jnp.float32)
    bound1 = 1.0 / (D_IN ** 0.5)
    w1 = jax.random.uniform(k1, (D_IN, H), minval=-bound1, maxval=bound1,
                            dtype=jnp.float32)
    b1 = jax.random.uniform(kb1, (H,), minval=-bound1, maxval=bound1,
                            dtype=jnp.float32)
    bound2 = 1.0 / (H ** 0.5)
    w2 = jax.random.uniform(k2, (H, D_OUT), minval=-bound2, maxval=bound2,
                            dtype=jnp.float32)
    b2 = jax.random.uniform(kb2, (D_OUT,), minval=-bound2, maxval=bound2,
                            dtype=jnp.float32)

    # One-time parameter prep (hoisted out of the per-call path).
    w1_p, b1_p, w2_p, b2_p = prepare_params(w1, b1, w2, b2)

    out = mlp_forward(x, w1_p, b1_p, w2_p, b2_p)
    out = jax.block_until_ready(out)

    ref = reference_forward(x, w1, b1, w2, b2)
    assert out.shape == (BATCH, D_OUT)
    # bf16 MXU inputs (+ bf16 epilogue on v6e/v7x) with f32 accumulation:
    # relaxed tolerance vs the pure-f32 reference.
    assert jnp.allclose(out.astype(jnp.float32), ref, atol=5e-2, rtol=5e-2)

    print("KERNEL_OK")
</pallas_src>

<mosaic_0001>
module attributes {stable_mosaic.version = 11 : i64} {
  func.func @mlp_kernel(%arg0: i32, %arg1: memref<16x32xbf16, #tpu.memory_space<vmem>>, %arg2: memref<32x128xbf16, #tpu.memory_space<vmem>>, %arg3: memref<1x128xbf16, #tpu.memory_space<vmem>>, %arg4: memref<128x16xbf16, #tpu.memory_space<vmem>>, %arg5: memref<1x16xbf16, #tpu.memory_space<vmem>>, %arg6: memref<16x16xbf16, #tpu.memory_space<vmem>>) attributes {dimension_semantics = [#tpu.dimension_semantics<parallel>], iteration_bounds = array<i64: 1>, scalar_prefetch = 0 : i64, scratch_operands = 0 : i64, tpu.core_type = #tpu.core_type<tc>, window_params = [{transform_indices = @transform_0, window_bounds = array<i64: 16, 32>}, {pipeline_mode = #tpu.pipeline_mode<synchronous>, transform_indices = @transform_1, window_bounds = array<i64: 32, 128>}, {pipeline_mode = #tpu.pipeline_mode<synchronous>, transform_indices = @transform_2, window_bounds = array<i64: 1, 128>}, {pipeline_mode = #tpu.pipeline_mode<synchronous>, transform_indices = @transform_3, window_bounds = array<i64: 128, 16>}, {pipeline_mode = #tpu.pipeline_mode<synchronous>, transform_indices = @transform_4, window_bounds = array<i64: 1, 16>}, {transform_indices = @transform_5, window_bounds = array<i64: 16, 16>}]} {
    %c0 = arith.constant 0 : index
    %c0_0 = arith.constant 0 : index
    %0 = vector.load %arg1[%c0, %c0_0] : memref<16x32xbf16, #tpu.memory_space<vmem>>, vector<16x32xbf16>
    %c0_1 = arith.constant 0 : index
    %c0_2 = arith.constant 0 : index
    %1 = vector.load %arg2[%c0_1, %c0_2] : memref<32x128xbf16, #tpu.memory_space<vmem>>, vector<32x128xbf16>
    %cst = arith.constant dense<0.000000e+00> : vector<16x128xf32>
    %2 = tpu.matmul %0, %1, %cst {dimension_numbers = #tpu.dot_dimension_numbers<[1], [0], [0], [1], [0, 0, 1, 1], [], []>} : vector<16x32xbf16>, vector<32x128xbf16>, vector<16x128xf32> -> vector<16x128xf32>
    %3 = arith.truncf %2 : vector<16x128xf32> to vector<16x128xbf16>
    %c0_3 = arith.constant 0 : index
    %c0_4 = arith.constant 0 : index
    %4 = vector.load %arg3[%c0_3, %c0_4] : memref<1x128xbf16, #tpu.memory_space<vmem>>, vector<1x128xbf16>
    %5 = vector.broadcast %4 : vector<1x128xbf16> to vector<16x128xbf16>
    %6 = arith.addf %3, %5 : vector<16x128xbf16>
    %cst_5 = arith.constant 0.000000e+00 : bf16
    %7 = vector.broadcast %cst_5 : bf16 to vector<16x128xbf16>
    %8 = arith.maximumf %6, %7 : vector<16x128xbf16>
    %c0_6 = arith.constant 0 : index
    %c0_7 = arith.constant 0 : index
    %9 = vector.load %arg4[%c0_6, %c0_7] : memref<128x16xbf16, #tpu.memory_space<vmem>>, vector<128x16xbf16>
    %cst_8 = arith.constant dense<0.000000e+00> : vector<16x16xf32>
    %10 = tpu.matmul %8, %9, %cst_8 {dimension_numbers = #tpu.dot_dimension_numbers<[1], [0], [0], [1], [0, 0, 1, 1], [], []>} : vector<16x128xbf16>, vector<128x16xbf16>, vector<16x16xf32> -> vector<16x16xf32>
    %11 = arith.truncf %10 : vector<16x16xf32> to vector<16x16xbf16>
    %c0_9 = arith.constant 0 : index
    %c0_10 = arith.constant 0 : index
    %12 = vector.load %arg5[%c0_9, %c0_10] : memref<1x16xbf16, #tpu.memory_space<vmem>>, vector<1x16xbf16>
    %13 = vector.broadcast %12 : vector<1x16xbf16> to vector<16x16xbf16>
    %14 = arith.addf %11, %13 : vector<16x16xbf16>
    %cst_11 = arith.constant 0.000000e+00 : bf16
    %15 = vector.broadcast %cst_11 : bf16 to vector<16x16xbf16>
    %16 = arith.maximumf %14, %15 : vector<16x16xbf16>
    %c0_12 = arith.constant 0 : index
    %c0_13 = arith.constant 0 : index
    %17 = vector.load %arg6[%c0_12, %c0_13] : memref<16x16xbf16, #tpu.memory_space<vmem>>, vector<16x16xbf16>
    tpu.vector_store %arg6[%c0_12, %c0_13], %16 {strides = array<i32>} : memref<16x16xbf16, #tpu.memory_space<vmem>>, vector<16x16xbf16>,
    return
  }
  func.func @transform_0(%arg0: i32) -> (i32, i32) {
    %c0_i32 = arith.constant 0 : i32
    %c0_i32_0 = arith.constant 0 : i32
    return %arg0, %c0_i32 : i32, i32
  }
  func.func @transform_1(%arg0: i32) -> (i32, i32) {
    %c0_i32 = arith.constant 0 : i32
    %c0_i32_0 = arith.constant 0 : i32
    %c0_i32_1 = arith.constant 0 : i32
    return %c0_i32, %c0_i32_0 : i32, i32
  }
  func.func @transform_2(%arg0: i32) -> (i32, i32) {
    %c0_i32 = arith.constant 0 : i32
    %c0_i32_0 = arith.constant 0 : i32
    %c0_i32_1 = arith.constant 0 : i32
    return %c0_i32, %c0_i32_0 : i32, i32
  }
  func.func @transform_3(%arg0: i32) -> (i32, i32) {
    %c0_i32 = arith.constant 0 : i32
    %c0_i32_0 = arith.constant 0 : i32
    %c0_i32_1 = arith.constant 0 : i32
    return %c0_i32, %c0_i32_0 : i32, i32
  }
  func.func @transform_4(%arg0: i32) -> (i32, i32) {
    %c0_i32 = arith.constant 0 : i32
    %c0_i32_0 = arith.constant 0 : i32
    %c0_i32_1 = arith.constant 0 : i32
    return %c0_i32, %c0_i32_0 : i32, i32
  }
  func.func @transform_5(%arg0: i32) -> (i32, i32) {
    %c0_i32 = arith.constant 0 : i32
    %c0_i32_0 = arith.constant 0 : i32
    return %arg0, %c0_i32 : i32, i32
  }
}

</mosaic_0001>

<llo_original>
// kernel: mlp_forward.1
$region0: #{mlp_forward.1}
  #allocation0 [shape = 'u32[]', space=smem, size = 0x4, offset = 0x4, fixed_abs, tag = 'smem constant byte address 0x4 - core index']
  #allocation1 [shape = 'u32[144,128]{1,0:T(1,128)}', space=vmem, size = 0x12000, scoped, tag = 'internal scratch']
  %s0 = inlined_call_operand.vmem [shape: bf16[16,32], index: 0, kind: input, shape index: {}]
  %s1 = inlined_call_operand.vmem [shape: bf16[32,128], index: 1, kind: input, shape index: {}]
  %s2 = inlined_call_operand.vmem [shape: bf16[1,128], index: 2, kind: input, shape index: {}]
  %s3 = inlined_call_operand.vmem [shape: bf16[128,16], index: 3, kind: input, shape index: {}]
  %s4 = inlined_call_operand.vmem [shape: bf16[1,16], index: 4, kind: input, shape index: {}]
  %s5 = inlined_call_operand.vmem [shape: bf16[16,16], index: 5, kind: output, shape index: {}]
  %s6 = sld [smem:[#allocation0]]
  $region30: #{mlp_forward.1} parent=0
    _
  %s8 = ssub.s32 1, %s6
  %s9 = scalar_select 0, %s8, %s6
  // Predicated region
  $region2: #{mlp_forward.1} parent=0 // pred_check
    _
  $region3: #{mlp_forward.1} parent=0 // pred_check_branch
    %11 = sbr.rel (0) target = $region5
  $region4: #{mlp_forward.1} parent=0 // pred_region
    _
  $region5: #{mlp_forward.1} parent=0 // pred_fallthru
    _
  // Predicated region
  $region6: #{mlp_forward.1} parent=0 // pred_check
    _
  $region7: #{mlp_forward.1} parent=0 // pred_check_branch
    %13 = sbr.rel (0) target = $region9
  $region8: #{mlp_forward.1} parent=0 // pred_region
    _
  $region9: #{mlp_forward.1} parent=0 // pred_fallthru
    _
  // Predicated region
  $region10: #{mlp_forward.1} parent=0 // pred_check
    _
  $region11: #{mlp_forward.1} parent=0 // pred_check_branch
    %15 = sbr.rel (0) target = $region13
  $region12: #{mlp_forward.1} parent=0 // pred_region
    _
  $region13: #{mlp_forward.1} parent=0 // pred_fallthru
    _
  // Predicated region
  $region14: #{mlp_forward.1} parent=0 // pred_check
    _
  $region15: #{mlp_forward.1} parent=0 // pred_check_branch
    %17 = sbr.rel (0) target = $region17
  $region16: #{mlp_forward.1} parent=0 // pred_region
    _
  $region17: #{mlp_forward.1} parent=0 // pred_fallthru
    _
  // Predicated region
  $region18: #{mlp_forward.1} parent=0 // pred_check
    _
  $region19: #{mlp_forward.1} parent=0 // pred_check_branch
    %19 = sbr.rel (0) target = $region21
  $region20: #{mlp_forward.1} parent=0 // pred_region
    _
  $region21: #{mlp_forward.1} parent=0 // pred_fallthru
    _
  %v21 = vld [vmem:[%s0] sm:$0xf]
  %v22 = vld [vmem:[%s0 + $0x4] sm:$0xf]
  %v23 = vld [vmem:[%s1] sm:$0xf]
  %v24 = vld [vmem:[%s1 + $0x4] sm:$0xf]
  %v25 = vld [vmem:[%s1 + $0x8] sm:$0xf]
  %v26 = vld [vmem:[%s1 + $0xc] sm:$0xf]
  %v29 = vunpack.c.l.b16 %v21
  %v30 = vunpack.c.l.b16 %v22
  %v31 = vpack.c.b16 %v30, %v29
  %v36 = vunpack.c.l.b16 %v23
  %v37 = vunpack.c.l.b16 %v24
  %v38 = vunpack.c.l.b16 %v25
  %v39 = vunpack.c.l.b16 %v26
  %v40 = vpack.c.b16 %v37, %v36
  %v41 = vpack.c.b16 %v39, %v38
  %vm44 = vcmask 261120
  %v46 = vsel %vm44, %v31, 0
  %48 = vmatprep.subr.bf16.mxu0 0
  %49 = vmatpush1.bf16.msra.mxu0 %v40
  %50 = vmatprep.subr.bf16.mxu0 0
  %51 = vmatpush1.bf16.msra.mxu0 %v41
  %52 = vmatprep.subr.bf16.mxu0 0
  %53 = vmatpush1.bf16.msra.mxu0 0
  %54 = vmatprep.subr.bf16.mxu0 0
  %55 = vmatpush1.bf16.msra.mxu0 0
  %56 = vmatprep.subr.bf16.mxu0 0
  %57 = vmatpush1.bf16.msra.mxu0 0
  %58 = vmatprep.subr.bf16.mxu0 0
  %59 = vmatpush1.bf16.msra.mxu0 0
  %60 = vmatprep.subr.bf16.mxu0 0
  %61 = vmatpush1.bf16.msra.mxu0 0
  %62 = vmatprep.subr.bf16.mxu0 0
  %63 = vmatpush1.bf16.msra.mxu0 0
  %64 = vmatprep.subr.bf16.mxu0 0
  %65 = vmatpush1.bf16.msra.mxu0 0
  %66 = vmatprep.subr.bf16.mxu0 0
  %67 = vmatpush1.bf16.msra.mxu0 0
  %68 = vmatprep.subr.bf16.mxu0 0
  %69 = vmatpush1.bf16.msra.mxu0 0
  %70 = vmatprep.subr.bf16.mxu0 0
  %71 = vmatpush1.bf16.msra.mxu0 0
  %72 = vmatprep.subr.bf16.mxu0 0
  %73 = vmatpush1.bf16.msra.mxu0 0
  %74 = vmatprep.subr.bf16.mxu0 0
  %75 = vmatpush1.bf16.msra.mxu0 0
  %76 = vmatprep.subr.bf16.mxu0 0
  %77 = vmatpush1.bf16.msra.mxu0 0
  %78 = vmatprep.subr.bf16.mxu0 0
  %79 = vmatpush1.bf16.msra.mxu0 0
  %80 = vmatprep.mubr.bf16.mxu0 0
  %81 = vmatmul.mubr.bf16.gmra.mrb[0].mxu0 %v46
  %v82 = vpop.f32.mrb[0].mxu0
  %v83 = vadd.f32 0.0, %v82
  %v84 = vpop.f32.mrb[0].mxu0
  %v85 = vpop.f32.mrb[0].mxu0
  %v86 = vadd.f32 0.0, %v85
  %v87 = vpop.f32.mrb[0].mxu0
  %88 = vdwg.mxu0
  %v89 = vpack.c.bf16 %v86, %v83
  %v90 = vld [vmem:[%s2] sm:$0x1]
  %v92 = vpack.i.b16 %v90, %v90
  %v94 = vlaneseq
  %v95 = vshrl.u32 %v94, 7
  %v96 = vsub.s32 0, %v95
  %v97 = vrot.slane %v92, %v96
  %v98 = vadd.bf16 %v89, %v97
  %v99 = vmax.bf16 %v98, 0
  %v100 = vld [vmem:[%s3] sm:$0xf]
  %v101 = vld [vmem:[%s3 + $0x4] sm:$0xf]
  %v102 = vld [vmem:[%s3 + $0x8] sm:$0xf]
  %v103 = vld [vmem:[%s3 + $0xc] sm:$0xf]
  %v104 = vld [vmem:[%s3 + $0x10] sm:$0xf]
  %v105 = vld [vmem:[%s3 + $0x14] sm:$0xf]
  %v106 = vld [vmem:[%s3 + $0x18] sm:$0xf]
  %v107 = vld [vmem:[%s3 + $0x1c] sm:$0xf]
  %v108 = vld [vmem:[%s3 + $0x20] sm:$0xf]
  %v109 = vld [vmem:[%s3 + $0x24] sm:$0xf]
  %v110 = vld [vmem:[%s3 + $0x28] sm:$0xf]
  %v111 = vld [vmem:[%s3 + $0x2c] sm:$0xf]
  %v112 = vld [vmem:[%s3 + $0x30] sm:$0xf]
  %v113 = vld [vmem:[%s3 + $0x34] sm:$0xf]
  %v114 = vld [vmem:[%s3 + $0x38] sm:$0xf]
  %v115 = vld [vmem:[%s3 + $0x3c] sm:$0xf]
  %v132 = vunpack.c.l.b16 %v100
  %v133 = vunpack.c.l.b16 %v101
  %v134 = vunpack.c.l.b16 %v102
  %v135 = vunpack.c.l.b16 %v103
  %v136 = vunpack.c.l.b16 %v104
  %v137 = vunpack.c.l.b16 %v105
  %v138 = vunpack.c.l.b16 %v106
  %v139 = vunpack.c.l.b16 %v107
  %v140 = vunpack.c.l.b16 %v108
  %v141 = vunpack.c.l.b16 %v109
  %v142 = vunpack.c.l.b16 %v110
  %v143 = vunpack.c.l.b16 %v111
  %v144 = vunpack.c.l.b16 %v112
  %v145 = vunpack.c.l.b16 %v113
  %v146 = vunpack.c.l.b16 %v114
  %v147 = vunpack.c.l.b16 %v115
  %v148 = vpack.c.b16 %v133, %v132
  %v149 = vpack.c.b16 %v135, %v134
  %v150 = vpack.c.b16 %v137, %v136
  %v151 = vpack.c.b16 %v139, %v138
  %v152 = vpack.c.b16 %v141, %v140
  %v153 = vpack.c.b16 %v143, %v142
  %v154 = vpack.c.b16 %v145, %v144
  %v155 = vpack.c.b16 %v147, %v146
  %164 = vmatprep.subr.bf16.mxu0 0
  %165 = vmatpush1.bf16.msra.mxu0 %v148
  %166 = vmatprep.subr.bf16.mxu0 0
  %167 = vmatpush1.bf16.msra.mxu0 %v149
  %168 = vmatprep.subr.bf16.mxu0 0
  %169 = vmatpush1.bf16.msra.mxu0 %v150
  %170 = vmatprep.subr.bf16.mxu0 0
  %171 = vmatpush1.bf16.msra.mxu0 %v151
  %172 = vmatprep.subr.bf16.mxu0 0
  %173 = vmatpush1.bf16.msra.mxu0 %v152
  %174 = vmatprep.subr.bf16.mxu0 0
  %175 = vmatpush1.bf16.msra.mxu0 %v153
  %176 = vmatprep.subr.bf16.mxu0 0
  %177 = vmatpush1.bf16.msra.mxu0 %v154
  %178 = vmatprep.subr.bf16.mxu0 0
  %179 = vmatpush1.bf16.msra.mxu0 %v155
  %180 = vmatprep.subr.bf16.mxu0 0
  %181 = vmatpush1.bf16.msra.mxu0 0
  %182 = vmatprep.subr.bf16.mxu0 0
  %183 = vmatpush1.bf16.msra.mxu0 0
  %184 = vmatprep.subr.bf16.mxu0 0
  %185 = vmatpush1.bf16.msra.mxu0 0
  %186 = vmatprep.subr.bf16.mxu0 0
  %187 = vmatpush1.bf16.msra.mxu0 0
  %188 = vmatprep.subr.bf16.mxu0 0
  %189 = vmatpush1.bf16.msra.mxu0 0
  %190 = vmatprep.subr.bf16.mxu0 0
  %191 = vmatpush1.bf16.msra.mxu0 0
  %192 = vmatprep.subr.bf16.mxu0 0
  %193 = vmatpush1.bf16.msra.mxu0 0
  %194 = vmatprep.subr.bf16.mxu0 0
  %195 = vmatpush1.bf16.msra.mxu0 0
  %196 = vmatprep.mubr.bf16.mxu0 0
  %197 = vmatmul.mubr.bf16.gmra.mrb[0].mxu0 %v99
  %v198 = vpop.f32.mrb[0].mxu0
  %v199 = vadd.f32 0.0, %v198
  %v200 = vpop.f32.mrb[0].mxu0
  %v201 = vpop.f32.mrb[0].mxu0
  %v202 = vadd.f32 0.0, %v201
  %v203 = vpop.f32.mrb[0].mxu0
  %204 = vdwg.mxu0
  %v205 = vpack.c.bf16 %v202, %v199
  %v206 = vld [vmem:[%s4] sm:$0x1]
  %v208 = vpack.i.b16 %v206, %v206
  %v210 = vlaneseq
  %v211 = vshrl.u32 %v210, 7
  %v212 = vsub.s32 0, %v211
  %v213 = vrot.slane %v208, %v212
  %v214 = vadd.bf16 %v205, %v213
  %v215 = vmax.bf16 %v214, 0
  %v217 = vunpack.c.l.b16 %v215
  %v218 = vunpack.c.h.b16 %v215
  %v219 = vpack.c.b16 %v217, %v217
  %v220 = vpack.c.b16 %v218, %v218
  %vm223 = vcmask 125952
  %224 = vst.msk [vmem:[%s5] sm:$0xf] %vm223, %v219
  %225 = vst.msk [vmem:[%s5 + $0x4] sm:$0xf] %vm223, %v220
  // Predicated region
  $region22: #{mlp_forward.1} parent=0 // pred_check
    _
  $region23: #{mlp_forward.1} parent=0 // pred_check_branch
    %227 = sbr.rel (0) target = $region25
  $region24: #{mlp_forward.1} parent=0 // pred_region
    _
  $region25: #{mlp_forward.1} parent=0 // pred_fallthru
    _
  // Predicated region
  $region26: #{mlp_forward.1} parent=0 // pred_check
    _
  $region27: #{mlp_forward.1} parent=0 // pred_check_branch
    %229 = sbr.rel (0) target = $region29
  $region28: #{mlp_forward.1} parent=0 // pred_region
    _
  $region29: #{mlp_forward.1} parent=0 // pred_fallthru
    _

</llo_original>
